<compile_context>
chip_gen: v7x
topology: tpu7x:2x2x1
jax: 0.10.0
libtpu: 0.0.40
codegen_flags: <defaults>
</compile_context>

<pallas_src>
import math
import functools

import jax
import jax.numpy as jnp
from jax.experimental import pallas as pl
from jax.experimental.pallas import tpu as pltpu


def _round_up(v, m):
    return -(-v // m) * m


def _taylor_kernel(x_ref, o_ref, scratch_ref, *, D, inv_rrd, inv_r2, chunk_lanes):
    """One row tile: x [tm, D] -> out [tm, 1 + 2D + D(D-1)//2].

    The row output is assembled chunk-by-chunk in `scratch_ref` (output dtype)
    and flushed with wide, 128-lane-aligned stores to o_ref.  All offsets and
    widths are static Python ints.
    """
    odtype = o_ref.dtype
    x = x_ref[...].astype(jnp.float32)            # [tm, D]
    tm = x.shape[0]

    xs = x * inv_rrd                              # x * D**-0.25
    diag = (xs * xs) * inv_r2                     # x*x / (sqrt(D)*sqrt(2))

    state = {"goff": 0}                           # global output column offset

    def emit(piece):                              # piece: [tm, w]
        w = piece.shape[1]
        done = 0
        goff = state["goff"]
        while done < w:
            loc = goff % chunk_lanes
            take = min(w - done, chunk_lanes - loc)
            scratch_ref[:, loc:loc + take] = (
                piece[:, done:done + take].astype(odtype))
            done += take
            goff += take
            if goff % chunk_lanes == 0:           # chunk full -> aligned flush
                base = goff - chunk_lanes
                o_ref[:, base:base + chunk_lanes] = scratch_ref[:, :chunk_lanes]
        state["goff"] = goff

    emit(jnp.ones((tm, 1), odtype))               # section 0: ones
    emit(xs)                                      # section 1: x / rrd
    emit(diag)                                    # section 2: x*x / (rd*sqrt(2))
    # section 3: strict upper triangle of x x^T, row-major (i < j), / sqrt(D)
    # TODO(synk): for D >~ 128 convert this unrolled loop into a fori_loop over
    # uniform-width work units to keep Mosaic code size / compile time bounded.
    for i in range(D - 1):
        emit(xs[:, i:i + 1] * xs[:, i + 1:])      # [tm, D-1-i]

    goff = state["goff"]
    tail = goff % chunk_lanes
    if tail:                                      # final partial chunk
        base = goff - tail
        o_ref[:, base:base + tail] = scratch_ref[:, :tail]


def _vmem_config():
    """(budget_bytes, vmem_limit_bytes) picked per chip generation."""
    try:
        kind = jax.devices()[0].device_kind.lower()
    except Exception:
        kind = ""
    if ("v5" in kind) or ("v6" in kind):
        return 28 * 2**20, 64 * 2**20     # 128 MiB physical VMEM: bigger tiles
    if "v7" in kind:
        return 20 * 2**20, 32 * 2**20     # 64 MiB physical: leave headroom
    return 10 * 2**20, None               # unknown / older parts: conservative


def _choose_tm(N, D, out_dim, chunk_w, dtype, budget):
    """VMEM-budgeted row tile, multiple of the dtype's sublane tile."""
    itemsize = jnp.dtype(dtype).itemsize
    sub = {4: 8, 2: 16, 1: 32}.get(itemsize, 8)
    # Per-row bytes: double-buffered in/out blocks + scratch chunk + f32
    # working set (xs, diag, one strip + rotate temps) + slack.
    per_row = (2 * D * itemsize + 2 * out_dim * itemsize
               + chunk_w * itemsize + 4 * (4 * D) + 64)
    tm = max(sub, min(1024, budget // per_row))
    # keep >= ~8 grid steps when the input is big enough, so both v7x
    # TensorCores get several iterations and the pipeline can overlap DMAs.
    tm = min(tm, _round_up(-(-N // 8), sub))
    tm = max(sub, (tm // sub) * sub)
    return tm


def taylor_feature_map(x, *, chunk_lanes=512):
    """x: [..., D] -> [..., 1 + 2*D + D*(D-1)//2]"""
    assert chunk_lanes % 128 == 0 and chunk_lanes >= 128
    D = x.shape[-1]
    lead = x.shape[:-1]
    N = int(math.prod(lead)) if lead else 1
    out_dim = 1 + 2 * D + D * (D - 1) // 2

    inv_rrd = 1.0 / math.sqrt(math.sqrt(D))       # D**-0.25
    inv_r2 = 1.0 / math.sqrt(2.0)

    xf = x.reshape(N, D)

    chunk_w = min(chunk_lanes, _round_up(out_dim, 128))
    budget, vmem_limit = _vmem_config()
    tm = _choose_tm(N, D, out_dim, chunk_w, x.dtype, budget)
    grid = (pl.cdiv(N, tm),)                      # partial last block, no pad

    kern = functools.partial(_taylor_kernel, D=D, inv_rrd=inv_rrd,
                             inv_r2=inv_r2, chunk_lanes=chunk_lanes)

    out = pl.pallas_call(
        kern,
        out_shape=jax.ShapeDtypeStruct((N, out_dim), x.dtype),
        grid=grid,
        in_specs=[pl.BlockSpec((tm, D), lambda i: (i, 0))],
        out_specs=pl.BlockSpec((tm, out_dim), lambda i: (i, 0)),
        scratch_shapes=[pltpu.VMEM((tm, chunk_w), x.dtype)],
        compiler_params=pltpu.CompilerParams(
            dimension_semantics=("parallel",),
            vmem_limit_bytes=vmem_limit),
    )(xf)

    return out.reshape(*lead, out_dim)


def _reference(x):
    """Pure-JAX reference mirroring the torch module (compute f32, cast back)."""
    D = x.shape[-1]
    rd = math.sqrt(D)
    rrd = math.sqrt(rd)
    r2 = math.sqrt(2)
    xf = x.astype(jnp.float32)
    z = xf[..., :, None] * xf[..., None, :]
    iu, ju = jnp.triu_indices(D, k=1)             # row-major, same as torch
    x2_1 = z[..., iu, ju]
    diag = jnp.arange(D)
    x2_2 = z[..., diag, diag]
    out = jnp.concatenate(
        [jnp.ones_like(xf[..., 0:1]), xf / rrd, x2_2 / (rd * r2), x2_1 / rd],
        axis=-1)
    return out.astype(x.dtype)


if __name__ == "__main__":
    key = jax.random.PRNGKey(0)
    k1, k2, k3, k4 = jax.random.split(key, 4)

    # 1) small shapes: batch=2, seq=8, heads=2, head_dim=16
    x1 = jax.random.normal(k1, (2, 8, 2, 16), dtype=jnp.float32)
    o1 = jax.block_until_ready(taylor_feature_map(x1))
    r1 = _reference(x1)
    assert o1.shape == r1.shape, (o1.shape, r1.shape)
    assert jnp.allclose(o1, r1, atol=1e-5, rtol=1e-5), "f32 small mismatch"

    # 2) non-divisible row count -> exercises the partial last block
    x2 = jax.random.normal(k2, (3, 67, 2, 16), dtype=jnp.float32)
    o2 = jax.block_until_ready(taylor_feature_map(x2))
    r2_ = _reference(x2)
    assert o2.shape == r2_.shape, (o2.shape, r2_.shape)
    assert jnp.allclose(o2, r2_, atol=1e-5, rtol=1e-5), "f32 partial-block mismatch"

    # 3) bf16 path (sublane tile of 16)
    x3 = jax.random.normal(k3, (2, 8, 2, 16), dtype=jnp.float32).astype(jnp.bfloat16)
    o3 = jax.block_until_ready(taylor_feature_map(x3))
    r3 = _reference(x3)
    assert o3.shape == r3.shape, (o3.shape, r3.shape)
    assert jnp.allclose(o3.astype(jnp.float32), r3.astype(jnp.float32),
                        atol=2e-2, rtol=2e-2), "bf16 mismatch"

    # 4) head_dim=32 -> out_dim=561 > 512: exercises the aligned chunk split/flush
    x4 = jax.random.normal(k4, (2, 8, 32), dtype=jnp.float32)
    o4 = jax.block_until_ready(taylor_feature_map(x4))
    r4 = _reference(x4)
    assert o4.shape == r4.shape, (o4.shape, r4.shape)
    assert jnp.allclose(o4, r4, atol=1e-5, rtol=1e-5), "f32 chunked mismatch"

    print("KERNEL_OK")
</pallas_src>

<mosaic_0001>
module attributes {stable_mosaic.version = 11 : i64} {
  func.func @_taylor_kernel(%arg0: i32, %arg1: memref<8x16xf32, #tpu.memory_space<vmem>>, %arg2: memref<8x153xf32, #tpu.memory_space<vmem>>, %arg3: memref<8x256xf32, #tpu.memory_space<vmem>>) attributes {dimension_semantics = [#tpu.dimension_semantics<parallel>], iteration_bounds = array<i64: 4>, scalar_prefetch = 0 : i64, scratch_operands = 1 : i64, tpu.core_type = #tpu.core_type<tc>, window_params = [{transform_indices = @transform_0, window_bounds = array<i64: 8, 16>}, {transform_indices = @transform_1, window_bounds = array<i64: 8, 153>}]} {
    %c0 = arith.constant 0 : index
    %c0_0 = arith.constant 0 : index
    %0 = vector.load %arg1[%c0, %c0_0] : memref<8x16xf32, #tpu.memory_space<vmem>>, vector<8x16xf32>
    %cst = arith.constant 5.000000e-01 : f32
    %1 = vector.broadcast %cst : f32 to vector<8x16xf32>
    %2 = arith.mulf %0, %1 : vector<8x16xf32>
    %3 = arith.mulf %2, %2 : vector<8x16xf32>
    %cst_1 = arith.constant 0.707106769 : f32
    %4 = vector.broadcast %cst_1 : f32 to vector<8x16xf32>
    %5 = arith.mulf %3, %4 : vector<8x16xf32>
    %cst_2 = arith.constant 1.000000e+00 : f32
    %6 = vector.broadcast %cst_2 : f32 to vector<8x1xf32>
    %c0_3 = arith.constant 0 : index
    %c0_4 = arith.constant 0 : index
    %7 = vector.load %arg3[%c0_3, %c0_4] : memref<8x256xf32, #tpu.memory_space<vmem>>, vector<8x1xf32>
    tpu.vector_store %arg3[%c0_3, %c0_4], %6 {strides = array<i32>} : memref<8x256xf32, #tpu.memory_space<vmem>>, vector<8x1xf32>,
    %c0_5 = arith.constant 0 : index
    %c1 = arith.constant 1 : index
    %8 = vector.load %arg3[%c0_5, %c1] : memref<8x256xf32, #tpu.memory_space<vmem>>, vector<8x16xf32>
    tpu.vector_store %arg3[%c0_5, %c1], %2 {strides = array<i32>} : memref<8x256xf32, #tpu.memory_space<vmem>>, vector<8x16xf32>,
    %c0_6 = arith.constant 0 : index
    %c17 = arith.constant 17 : index
    %9 = vector.load %arg3[%c0_6, %c17] : memref<8x256xf32, #tpu.memory_space<vmem>>, vector<8x16xf32>
    tpu.vector_store %arg3[%c0_6, %c17], %5 {strides = array<i32>} : memref<8x256xf32, #tpu.memory_space<vmem>>, vector<8x16xf32>,
    %10 = vector.extract_strided_slice %2 {offsets = [0, 0], sizes = [8, 1], strides = [1, 1]} : vector<8x16xf32> to vector<8x1xf32>
    %11 = vector.extract_strided_slice %2 {offsets = [0, 1], sizes = [8, 15], strides = [1, 1]} : vector<8x16xf32> to vector<8x15xf32>
    %12 = vector.broadcast %10 : vector<8x1xf32> to vector<8x15xf32>
    %13 = arith.mulf %12, %11 : vector<8x15xf32>
    %c0_7 = arith.constant 0 : index
    %c33 = arith.constant 33 : index
    %14 = vector.load %arg3[%c0_7, %c33] : memref<8x256xf32, #tpu.memory_space<vmem>>, vector<8x15xf32>
    tpu.vector_store %arg3[%c0_7, %c33], %13 {strides = array<i32>} : memref<8x256xf32, #tpu.memory_space<vmem>>, vector<8x15xf32>,
    %15 = vector.extract_strided_slice %2 {offsets = [0, 1], sizes = [8, 1], strides = [1, 1]} : vector<8x16xf32> to vector<8x1xf32>
    %16 = vector.extract_strided_slice %2 {offsets = [0, 2], sizes = [8, 14], strides = [1, 1]} : vector<8x16xf32> to vector<8x14xf32>
    %17 = vector.broadcast %15 : vector<8x1xf32> to vector<8x14xf32>
    %18 = arith.mulf %17, %16 : vector<8x14xf32>
    %c0_8 = arith.constant 0 : index
    %c48 = arith.constant 48 : index
    %19 = vector.load %arg3[%c0_8, %c48] : memref<8x256xf32, #tpu.memory_space<vmem>>, vector<8x14xf32>
    tpu.vector_store %arg3[%c0_8, %c48], %18 {strides = array<i32>} : memref<8x256xf32, #tpu.memory_space<vmem>>, vector<8x14xf32>,
    %20 = vector.extract_strided_slice %2 {offsets = [0, 2], sizes = [8, 1], strides = [1, 1]} : vector<8x16xf32> to vector<8x1xf32>
    %21 = vector.extract_strided_slice %2 {offsets = [0, 3], sizes = [8, 13], strides = [1, 1]} : vector<8x16xf32> to vector<8x13xf32>
    %22 = vector.broadcast %20 : vector<8x1xf32> to vector<8x13xf32>
    %23 = arith.mulf %22, %21 : vector<8x13xf32>
    %c0_9 = arith.constant 0 : index
    %c62 = arith.constant 62 : index
    %24 = vector.load %arg3[%c0_9, %c62] : memref<8x256xf32, #tpu.memory_space<vmem>>, vector<8x13xf32>
    tpu.vector_store %arg3[%c0_9, %c62], %23 {strides = array<i32>} : memref<8x256xf32, #tpu.memory_space<vmem>>, vector<8x13xf32>,
    %25 = vector.extract_strided_slice %2 {offsets = [0, 3], sizes = [8, 1], strides = [1, 1]} : vector<8x16xf32> to vector<8x1xf32>
    %26 = vector.extract_strided_slice %2 {offsets = [0, 4], sizes = [8, 12], strides = [1, 1]} : vector<8x16xf32> to vector<8x12xf32>
    %27 = vector.broadcast %25 : vector<8x1xf32> to vector<8x12xf32>
    %28 = arith.mulf %27, %26 : vector<8x12xf32>
    %c0_10 = arith.constant 0 : index
    %c75 = arith.constant 75 : index
    %29 = vector.load %arg3[%c0_10, %c75] : memref<8x256xf32, #tpu.memory_space<vmem>>, vector<8x12xf32>
    tpu.vector_store %arg3[%c0_10, %c75], %28 {strides = array<i32>} : memref<8x256xf32, #tpu.memory_space<vmem>>, vector<8x12xf32>,
    %30 = vector.extract_strided_slice %2 {offsets = [0, 4], sizes = [8, 1], strides = [1, 1]} : vector<8x16xf32> to vector<8x1xf32>
    %31 = vector.extract_strided_slice %2 {offsets = [0, 5], sizes = [8, 11], strides = [1, 1]} : vector<8x16xf32> to vector<8x11xf32>
    %32 = vector.broadcast %30 : vector<8x1xf32> to vector<8x11xf32>
    %33 = arith.mulf %32, %31 : vector<8x11xf32>
    %c0_11 = arith.constant 0 : index
    %c87 = arith.constant 87 : index
    %34 = vector.load %arg3[%c0_11, %c87] : memref<8x256xf32, #tpu.memory_space<vmem>>, vector<8x11xf32>
    tpu.vector_store %arg3[%c0_11, %c87], %33 {strides = array<i32>} : memref<8x256xf32, #tpu.memory_space<vmem>>, vector<8x11xf32>,
    %35 = vector.extract_strided_slice %2 {offsets = [0, 5], sizes = [8, 1], strides = [1, 1]} : vector<8x16xf32> to vector<8x1xf32>
    %36 = vector.extract_strided_slice %2 {offsets = [0, 6], sizes = [8, 10], strides = [1, 1]} : vector<8x16xf32> to vector<8x10xf32>
    %37 = vector.broadcast %35 : vector<8x1xf32> to vector<8x10xf32>
    %38 = arith.mulf %37, %36 : vector<8x10xf32>
    %c0_12 = arith.constant 0 : index
    %c98 = arith.constant 98 : index
    %39 = vector.load %arg3[%c0_12, %c98] : memref<8x256xf32, #tpu.memory_space<vmem>>, vector<8x10xf32>
    tpu.vector_store %arg3[%c0_12, %c98], %38 {strides = array<i32>} : memref<8x256xf32, #tpu.memory_space<vmem>>, vector<8x10xf32>,
    %40 = vector.extract_strided_slice %2 {offsets = [0, 6], sizes = [8, 1], strides = [1, 1]} : vector<8x16xf32> to vector<8x1xf32>
    %41 = vector.extract_strided_slice %2 {offsets = [0, 7], sizes = [8, 9], strides = [1, 1]} : vector<8x16xf32> to vector<8x9xf32>
    %42 = vector.broadcast %40 : vector<8x1xf32> to vector<8x9xf32>
    %43 = arith.mulf %42, %41 : vector<8x9xf32>
    %c0_13 = arith.constant 0 : index
    %c108 = arith.constant 108 : index
    %44 = vector.load %arg3[%c0_13, %c108] : memref<8x256xf32, #tpu.memory_space<vmem>>, vector<8x9xf32>
    tpu.vector_store %arg3[%c0_13, %c108], %43 {strides = array<i32>} : memref<8x256xf32, #tpu.memory_space<vmem>>, vector<8x9xf32>,
    %45 = vector.extract_strided_slice %2 {offsets = [0, 7], sizes = [8, 1], strides = [1, 1]} : vector<8x16xf32> to vector<8x1xf32>
    %46 = vector.extract_strided_slice %2 {offsets = [0, 8], sizes = [8, 8], strides = [1, 1]} : vector<8x16xf32> to vector<8x8xf32>
    %47 = vector.broadcast %45 : vector<8x1xf32> to vector<8x8xf32>
    %48 = arith.mulf %47, %46 : vector<8x8xf32>
    %c0_14 = arith.constant 0 : index
    %c117 = arith.constant 117 : index
    %49 = vector.load %arg3[%c0_14, %c117] : memref<8x256xf32, #tpu.memory_space<vmem>>, vector<8x8xf32>
    tpu.vector_store %arg3[%c0_14, %c117], %48 {strides = array<i32>} : memref<8x256xf32, #tpu.memory_space<vmem>>, vector<8x8xf32>,
    %50 = vector.extract_strided_slice %2 {offsets = [0, 8], sizes = [8, 1], strides = [1, 1]} : vector<8x16xf32> to vector<8x1xf32>
    %51 = vector.extract_strided_slice %2 {offsets = [0, 9], sizes = [8, 7], strides = [1, 1]} : vector<8x16xf32> to vector<8x7xf32>
    %52 = vector.broadcast %50 : vector<8x1xf32> to vector<8x7xf32>
    %53 = arith.mulf %52, %51 : vector<8x7xf32>
    %c0_15 = arith.constant 0 : index
    %c125 = arith.constant 125 : index
    %54 = vector.load %arg3[%c0_15, %c125] : memref<8x256xf32, #tpu.memory_space<vmem>>, vector<8x7xf32>
    tpu.vector_store %arg3[%c0_15, %c125], %53 {strides = array<i32>} : memref<8x256xf32, #tpu.memory_space<vmem>>, vector<8x7xf32>,
    %55 = vector.extract_strided_slice %2 {offsets = [0, 9], sizes = [8, 1], strides = [1, 1]} : vector<8x16xf32> to vector<8x1xf32>
    %56 = vector.extract_strided_slice %2 {offsets = [0, 10], sizes = [8, 6], strides = [1, 1]} : vector<8x16xf32> to vector<8x6xf32>
    %57 = vector.broadcast %55 : vector<8x1xf32> to vector<8x6xf32>
    %58 = arith.mulf %57, %56 : vector<8x6xf32>
    %c0_16 = arith.constant 0 : index
    %c132 = arith.constant 132 : index
    %59 = vector.load %arg3[%c0_16, %c132] : memref<8x256xf32, #tpu.memory_space<vmem>>, vector<8x6xf32>
    tpu.vector_store %arg3[%c0_16, %c132], %58 {strides = array<i32>} : memref<8x256xf32, #tpu.memory_space<vmem>>, vector<8x6xf32>,
    %60 = vector.extract_strided_slice %2 {offsets = [0, 10], sizes = [8, 1], strides = [1, 1]} : vector<8x16xf32> to vector<8x1xf32>
    %61 = vector.extract_strided_slice %2 {offsets = [0, 11], sizes = [8, 5], strides = [1, 1]} : vector<8x16xf32> to vector<8x5xf32>
    %62 = vector.broadcast %60 : vector<8x1xf32> to vector<8x5xf32>
    %63 = arith.mulf %62, %61 : vector<8x5xf32>
    %c0_17 = arith.constant 0 : index
    %c138 = arith.constant 138 : index
    %64 = vector.load %arg3[%c0_17, %c138] : memref<8x256xf32, #tpu.memory_space<vmem>>, vector<8x5xf32>
    tpu.vector_store %arg3[%c0_17, %c138], %63 {strides = array<i32>} : memref<8x256xf32, #tpu.memory_space<vmem>>, vector<8x5xf32>,
    %65 = vector.extract_strided_slice %2 {offsets = [0, 11], sizes = [8, 1], strides = [1, 1]} : vector<8x16xf32> to vector<8x1xf32>
    %66 = vector.extract_strided_slice %2 {offsets = [0, 12], sizes = [8, 4], strides = [1, 1]} : vector<8x16xf32> to vector<8x4xf32>
    %67 = vector.broadcast %65 : vector<8x1xf32> to vector<8x4xf32>
    %68 = arith.mulf %67, %66 : vector<8x4xf32>
    %c0_18 = arith.constant 0 : index
    %c143 = arith.constant 143 : index
    %69 = vector.load %arg3[%c0_18, %c143] : memref<8x256xf32, #tpu.memory_space<vmem>>, vector<8x4xf32>
    tpu.vector_store %arg3[%c0_18, %c143], %68 {strides = array<i32>} : memref<8x256xf32, #tpu.memory_space<vmem>>, vector<8x4xf32>,
    %70 = vector.extract_strided_slice %2 {offsets = [0, 12], sizes = [8, 1], strides = [1, 1]} : vector<8x16xf32> to vector<8x1xf32>
    %71 = vector.extract_strided_slice %2 {offsets = [0, 13], sizes = [8, 3], strides = [1, 1]} : vector<8x16xf32> to vector<8x3xf32>
    %72 = vector.broadcast %70 : vector<8x1xf32> to vector<8x3xf32>
    %73 = arith.mulf %72, %71 : vector<8x3xf32>
    %c0_19 = arith.constant 0 : index
    %c147 = arith.constant 147 : index
    %74 = vector.load %arg3[%c0_19, %c147] : memref<8x256xf32, #tpu.memory_space<vmem>>, vector<8x3xf32>
    tpu.vector_store %arg3[%c0_19, %c147], %73 {strides = array<i32>} : memref<8x256xf32, #tpu.memory_space<vmem>>, vector<8x3xf32>,
    %75 = vector.extract_strided_slice %2 {offsets = [0, 13], sizes = [8, 1], strides = [1, 1]} : vector<8x16xf32> to vector<8x1xf32>
    %76 = vector.extract_strided_slice %2 {offsets = [0, 14], sizes = [8, 2], strides = [1, 1]} : vector<8x16xf32> to vector<8x2xf32>
    %77 = vector.broadcast %75 : vector<8x1xf32> to vector<8x2xf32>
    %78 = arith.mulf %77, %76 : vector<8x2xf32>
    %c0_20 = arith.constant 0 : index
    %c150 = arith.constant 150 : index
    %79 = vector.load %arg3[%c0_20, %c150] : memref<8x256xf32, #tpu.memory_space<vmem>>, vector<8x2xf32>
    tpu.vector_store %arg3[%c0_20, %c150], %78 {strides = array<i32>} : memref<8x256xf32, #tpu.memory_space<vmem>>, vector<8x2xf32>,
    %80 = vector.extract_strided_slice %2 {offsets = [0, 14], sizes = [8, 1], strides = [1, 1]} : vector<8x16xf32> to vector<8x1xf32>
    %81 = vector.extract_strided_slice %2 {offsets = [0, 15], sizes = [8, 1], strides = [1, 1]} : vector<8x16xf32> to vector<8x1xf32>
    %82 = arith.mulf %80, %81 : vector<8x1xf32>
    %c0_21 = arith.constant 0 : index
    %c152 = arith.constant 152 : index
    %83 = vector.load %arg3[%c0_21, %c152] : memref<8x256xf32, #tpu.memory_space<vmem>>, vector<8x1xf32>
    tpu.vector_store %arg3[%c0_21, %c152], %82 {strides = array<i32>} : memref<8x256xf32, #tpu.memory_space<vmem>>, vector<8x1xf32>,
    %c0_22 = arith.constant 0 : index
    %c0_23 = arith.constant 0 : index
    %84 = vector.load %arg3[%c0_22, %c0_23] : memref<8x256xf32, #tpu.memory_space<vmem>>, vector<8x153xf32>
    %c0_24 = arith.constant 0 : index
    %c0_25 = arith.constant 0 : index
    %85 = vector.load %arg2[%c0_24, %c0_25] : memref<8x153xf32, #tpu.memory_space<vmem>>, vector<8x153xf32>
    tpu.vector_store %arg2[%c0_24, %c0_25], %84 {strides = array<i32>} : memref<8x153xf32, #tpu.memory_space<vmem>>, vector<8x153xf32>,
    return
  }
  func.func @transform_0(%arg0: i32) -> (i32, i32) {
    %c0_i32 = arith.constant 0 : i32
    %c0_i32_0 = arith.constant 0 : i32
    return %arg0, %c0_i32 : i32, i32
  }
  func.func @transform_1(%arg0: i32) -> (i32, i32) {
    %c0_i32 = arith.constant 0 : i32
    %c0_i32_0 = arith.constant 0 : i32
    return %arg0, %c0_i32 : i32, i32
  }
}

</mosaic_0001>

<llo_original>
// kernel: tpu_custom_call.1
$region0: #{tpu_custom_call.1}
  #allocation0 [shape = 'u32[]', space=smem, size = 0x4, offset = 0x4, fixed_abs, tag = 'smem constant byte address 0x4 - core index']
  #allocation1 [shape = 'u32[144,128]{1,0:T(1,128)}', space=vmem, size = 0x12000, scoped, tag = 'internal scratch']
  #allocation2 [shape = 'f32[8,256]{1,0:T(8,128)}', space=vmem, size = 0x2000, scoped, tag = 'scratch operand']
  %s0 = inlined_call_operand.vmem [shape: f32[32,16], index: 0, kind: input, shape index: {}]
  %s1 = inlined_call_operand.hbm [shape: f32[32,153], index: 1, kind: output, shape index: {}]
  %s2 = sld [smem:[#allocation0]]
  $region37: #{tpu_custom_call.1} parent=0
    _
  %s4 = ssub.s32 1, %s2
  %s5 = scalar_select 0, %s4, %s2
  $region1: #{tpu_custom_call.1} parent=0
    #allocation3 [shape = 'u8[16384]{0}', space=vmem, size = 0x4000, scoped, tag = 'output window, operand 0']
    #allocation4 [shape = 's32[2]{0}', space=sflag, size = 0x8, scoped, tag = 'scoped memory for tpu_custom_call.1']
    %6 = vsyncpa [#allocation4], 0
    %s7 = scalar_lea.sflag [#allocation4], 1
    %8 = vsyncpa %s7, 0
    loop: start=0, step=1, limit=6
    $region2: #{tpu_custom_call.1} parent=1 // loop_pre_header
      _
    $region3: #{tpu_custom_call.1} parent=1 // loop_header
      %s10 = sphi 0, %s14
      %p11 = scmp.ge.s32.totalorder %s10, 6
      %s20 = sphi 0, %s22
      %s23 = sphi 0, %s20
      %s24 = sphi 0, %s23
      %s40 = sphi 0, %s24
      %s46 = sphi 0, %s48
      %s49 = sphi 0, %s46
      %s50 = sphi 0, %s49
      %s66 = sphi 0, %s50
    $region4: #{tpu_custom_call.1} parent=1 // loop_header_branch
      %13 = sbr.rel (%p11) target = $region8
    $region5: #{tpu_custom_call.1} parent=1 // loop_body
      %s15 = ssub.s32 %s10, 1
      %s16 = ssub.s32 %s10, 2
      %s17 = sadd.s32 %s10, 1
      %s18 = ssub.s32 %s10, %s17
      %p19 = scmp.eq.s32.totalorder %s18, 0
      %s21 = sadd.s32 %s20, 1
      %s22 = scalar_select %p19, %s20, %s21
      %p25 = pneg %p19
      %p26 = scmp.eq.s32.totalorder %s10, 3
      %p27 = por %p25, %p26
      %p28 = scmp.ne.s32.totalorder %s20, %s23
      %p29 = scmp.eq.s32.totalorder %s10, 0
      %p30 = por %p28, %p29
      %p31 = scmp.ne.s32.totalorder %s20, %s23
      %p32 = scmp.eq.s32.totalorder %s15, 3
      %p33 = por %p31, %p32
      %p34 = scmp.ne.s32.totalorder %s23, %s24
      %p35 = scmp.eq.s32.totalorder %s15, 0
      %p36 = por %p34, %p35
      %p37 = scmp.ne.s32.totalorder %s23, %s24
      %p38 = scmp.eq.s32.totalorder %s16, 3
      %p39 = por %p37, %p38
      %p41 = scmp.ne.s32.totalorder %s24, %s40
      %p42 = scmp.eq.s32.totalorder %s16, 0
      %p43 = por %p41, %p42
      %s44 = ssub.s32 %s10, %s17
      %p45 = scmp.eq.s32.totalorder %s44, 0
      %s47 = sadd.s32 %s46, 1
      %s48 = scalar_select %p45, %s46, %s47
      %p51 = pneg %p45
      %p52 = scmp.eq.s32.totalorder %s10, 3
      %p53 = por %p51, %p52
      %p54 = scmp.ne.s32.totalorder %s46, %s49
      %p55 = scmp.eq.s32.totalorder %s10, 0
      %p56 = por %p54, %p55
      %p57 = scmp.ne.s32.totalorder %s46, %s49
      %p58 = scmp.eq.s32.totalorder %s15, 3
      %p59 = por %p57, %p58
      %p60 = scmp.ne.s32.totalorder %s49, %s50
      %p61 = scmp.eq.s32.totalorder %s15, 0
      %p62 = por %p60, %p61
      %p63 = scmp.ne.s32.totalorder %s49, %s50
      %p64 = scmp.eq.s32.totalorder %s16, 3
      %p65 = por %p63, %p64
      %p67 = scmp.ne.s32.totalorder %s50, %s66
      %p68 = scmp.eq.s32.totalorder %s16, 0
      %p69 = por %p67, %p68
      %p70 = scmp.le.s32.totalorder 1, %s10
      %p71 = scmp.lt.s32.totalorder %s10, 5
      %p72 = pnand %p70, %p71
      %p73 = pneg %p72
      // Predicated region
      $region9: #{tpu_custom_call.1} parent=5 // pred_check
        _
      $region10: #{tpu_custom_call.1} parent=5 // pred_check_branch
        %75 = sbr.rel (%p72) target = $region12
      $region11: #{tpu_custom_call.1} parent=5 // pred_region
        %s76 = ssub.s32 %s10, 1
      $region12: #{tpu_custom_call.1} parent=5 // pred_fallthru
        _
      %p77 = scmp.lt.s32.totalorder %s10, 4
      // Predicated region
      $region13: #{tpu_custom_call.1} parent=5 // pred_check
        %p78 = pneg %p77
      $region14: #{tpu_custom_call.1} parent=5 // pred_check_branch
        %80 = sbr.rel (%p78) target = $region16
      $region15: #{tpu_custom_call.1} parent=5 // pred_region
        // Predicated region
        $region17: #{tpu_custom_call.1} parent=15 // pred_check
          %p81 = pneg %p30
        $region18: #{tpu_custom_call.1} parent=15 // pred_check_branch
          %83 = sbr.rel (%p81) target = $region20
        $region19: #{tpu_custom_call.1} parent=15 // pred_region
          %p84 = scmp.lt.s32.totalorder %s10, 3
          %s85 = scalar_select %p84, %s10, 3
          %s86 = smul.addr %s85, 8
          %s87 = scalar_lea.vmem %s0, %s86
        $region20: #{tpu_custom_call.1} parent=15 // pred_fallthru
          _
      $region16: #{tpu_custom_call.1} parent=5 // pred_fallthru
        _
      %p88 = scmp.le.s32.totalorder 1, %s10
      %p89 = scmp.lt.s32.totalorder %s10, 5
      %p90 = pnand %p88, %p89
      %p91 = pneg %p90
      // Predicated region
      $region21: #{tpu_custom_call.1} parent=5 // pred_check
        _
      $region22: #{tpu_custom_call.1} parent=5 // pred_check_branch
        %93 = sbr.rel (%p90) target = $region24
      $region23: #{tpu_custom_call.1} parent=5 // pred_region
        %s94 = ssub.s32 %s10, 1
        %p95 = scmp.lt.s32.totalorder %s15, 3
        %s96 = scalar_select %p95, %s15, 3
        %s97 = smul.addr %s96, 8
        %s98 = scalar_lea.vmem %s0, %s97
        %p99 = pneg %p36
        %p100 = pneg %p33
        %p101 = pneg %p62
        %p102 = pneg %p59
        %s103 = sand.u32 %s49, 1
        %s104 = scalar_lea.sflag [#allocation4], %s103
        %s105 = sand.u32 %s49, 1
        %s106 = smul.addr %s105, 16
        %s107 = scalar_lea.vmem [#allocation3], %s106
        %p108 = scmp.lt.s32.totalorder %s15, 3
        %s109 = scalar_select %p108, %s15, 3
        %s110 = smul.addr %s109, 8
        %s111 = scalar_lea.vmem %s0, %s110
        %v112 = vld [vmem:[%s111] sm:$0xff]
        %v113 = vmul.f32 %v112, 0.5
        %v114 = vmul.f32 %v113, %v113
        %v115 = vmul.f32 %v114, 0.70710677
        %vm116 = vcmask 7168
        %117 = vst.msk [vmem:[#allocation2] sm:$0xff] %vm116, 1.0
        %119 = vrot.lane.b32.xlu0 %v113, 1
        %v120 = vpop.permute.xlu0 %119
        %vm122 = vcmask 138248
        %123 = vst.msk [vmem:[#allocation2] sm:$0xff] %vm122, %v120
        %125 = vrot.lane.b32.xlu0 %v115, 17
        %v126 = vpop.permute.xlu0 %125
        %vm128 = vcmask 269448
        %129 = vst.msk [vmem:[#allocation2] sm:$0xff] %vm128, %v126
        %130 = vset.pattern.permute.xlu0 0
        %131 = vperm.xlu0 %130, %v113
        %v132 = vpop.permute.xlu0 %131
        %v134 = vmul.f32 %v132, %v113
        %136 = vrot.lane.b32.xlu0 %v134, 32
        %v137 = vpop.permute.xlu0 %136
        %vm139 = vcmask 392456
        %140 = vst.msk [vmem:[#allocation2] sm:$0xff] %vm139, %v137
        %141 = vset.pattern.permute.xlu0 1
        %142 = vperm.xlu0 %141, %v113
        %v143 = vpop.permute.xlu0 %142
        %v145 = vmul.f32 %v143, %v113
        %147 = vrot.lane.b32.xlu0 %v145, 46
        %v148 = vpop.permute.xlu0 %147
        %vm150 = vcmask 507264
        %151 = vst.msk [vmem:[#allocation2] sm:$0xff] %vm150, %v148
        %152 = vset.pattern.permute.xlu0 2
        %153 = vperm.xlu0 %152, %v113
        %v154 = vpop.permute.xlu0 %153
        %v156 = vmul.f32 %v154, %v113
        %158 = vrot.lane.b32.xlu0 %v156, 59
        %v159 = vpop.permute.xlu0 %158
        %vm161 = vcmask 613872
        %162 = vst.msk [vmem:[#allocation2] sm:$0xff] %vm161, %v159
        %163 = vset.pattern.permute.xlu0 3
        %164 = vperm.xlu0 %163, %v113
        %v165 = vpop.permute.xlu0 %164
        %v167 = vmul.f32 %v165, %v113
        %169 = vrot.lane.b32.xlu0 %v167, 71
        %v170 = vpop.permute.xlu0 %169
        %vm172 = vcmask 712280
        %173 = vst.msk [vmem:[#allocation2] sm:$0xff] %vm172, %v170
        %174 = vset.pattern.permute.xlu0 4
        %175 = vperm.xlu0 %174, %v113
        %v176 = vpop.permute.xlu0 %175
        %v178 = vmul.f32 %v176, %v113
        %180 = vrot.lane.b32.xlu0 %v178, 82
        %v181 = vpop.permute.xlu0 %180
        %vm183 = vcmask 802488
        %184 = vst.msk [vmem:[#allocation2] sm:$0xff] %vm183, %v181
        %185 = vset.pattern.permute.xlu0 5
        %186 = vperm.xlu0 %185, %v113
        %v187 = vpop.permute.xlu0 %186
        %v189 = vmul.f32 %v187, %v113
        %191 = vrot.lane.b32.xlu0 %v189, 92
        %v192 = vpop.permute.xlu0 %191
        %vm194 = vcmask 884496
        %195 = vst.msk [vmem:[#allocation2] sm:$0xff] %vm194, %v192
        %196 = vset.pattern.permute.xlu0 6
        %197 = vperm.xlu0 %196, %v113
        %v198 = vpop.permute.xlu0 %197
        %v200 = vmul.f32 %v198, %v113
        %202 = vrot.lane.b32.xlu0 %v200, 101
        %v203 = vpop.permute.xlu0 %202
        %vm205 = vcmask 958304
        %206 = vst.msk [vmem:[#allocation2] sm:$0xff] %vm205, %v203
        %207 = vset.pattern.permute.xlu0 7
        %208 = vperm.xlu0 %207, %v113
        %v209 = vpop.permute.xlu0 %208
        %v211 = vmul.f32 %v209, %v113
        %213 = vrot.lane.b32.xlu0 %v211, 109
        %v214 = vpop.permute.xlu0 %213
        %vm216 = vcmask 1023912
        %217 = vst.msk [vmem:[#allocation2] sm:$0xff] %vm216, %v214
        %218 = vset.pattern.permute.xlu0 8
        %219 = vperm.xlu0 %218, %v113
        %v220 = vpop.permute.xlu0 %219
        %v222 = vmul.f32 %v220, %v113
        %224 = vrot.lane.b32.xlu0 %v222, 116
        %v225 = vpop.permute.xlu0 %224
        %vm227 = vcmask 1048552
        %228 = vst.msk [vmem:[#allocation2] sm:$0xff] %vm227, %v225
        %vm229 = vcmask 31744
        %230 = vst.msk [vmem:[#allocation2 + $0x8] sm:$0xff] %vm229, %v225
        %231 = vset.pattern.permute.xlu0 9
        %232 = vperm.xlu0 %231, %v113
        %v233 = vpop.permute.xlu0 %232
        %v235 = vmul.f32 %v233, %v113
        %237 = vrot.lane.b32.xlu0 %v235, 122
        %v238 = vpop.permute.xlu0 %237
        %vm240 = vcmask 80928
        %241 = vst.msk [vmem:[#allocation2 + $0x8] sm:$0xff] %vm240, %v238
        %242 = vset.pattern.permute.xlu0 10
        %243 = vperm.xlu0 %242, %v113
        %v244 = vpop.permute.xlu0 %243
        %v246 = vmul.f32 %v244, %v113
        %248 = vrot.lane.b32.xlu0 %v246, 127
        %v249 = vpop.permute.xlu0 %248
        %vm251 = vcmask 121936
        %252 = vst.msk [vmem:[#allocation2 + $0x8] sm:$0xff] %vm251, %v249
        %253 = vset.pattern.permute.xlu0 11
        %254 = vperm.xlu0 %253, %v113
        %v255 = vpop.permute.xlu0 %254
        %v257 = vmul.f32 %v255, %v113
        %259 = vrot.lane.b32.xlu0 %v257, 3
        %v260 = vpop.permute.xlu0 %259
        %vm262 = vcmask 154744
        %263 = vst.msk [vmem:[#allocation2 + $0x8] sm:$0xff] %vm262, %v260
        %264 = vset.pattern.permute.xlu0 12
        %265 = vperm.xlu0 %264, %v113
        %v266 = vpop.permute.xlu0 %265
        %v268 = vmul.f32 %v266, %v113
        %270 = vrot.lane.b32.xlu0 %v268, 6
        %v271 = vpop.permute.xlu0 %270
        %vm273 = vcmask 179352
        %274 = vst.msk [vmem:[#allocation2 + $0x8] sm:$0xff] %vm273, %v271
        %275 = vset.pattern.permute.xlu0 13
        %276 = vperm.xlu0 %275, %v113
        %v277 = vpop.permute.xlu0 %276
        %v279 = vmul.f32 %v277, %v113
        %281 = vrot.lane.b32.xlu0 %v279, 8
        %v282 = vpop.permute.xlu0 %281
        %vm284 = vcmask 195760
        %285 = vst.msk [vmem:[#allocation2 + $0x8] sm:$0xff] %vm284, %v282
        %286 = vrot.lane.b32.xlu0 %v113, 127
        %v287 = vpop.permute.xlu0 %286
        %v289 = vmul.f32 %v113, %v287
        %291 = vrot.lane.b32.xlu0 %v289, 10
        %v292 = vpop.permute.xlu0 %291
        %vm294 = vcmask 203968
        %295 = vst.msk [vmem:[#allocation2 + $0x8] sm:$0xff] %vm294, %v292
        %v296 = vld [vmem:[#allocation2] sm:$0xff]
        %v297 = vld [vmem:[#allocation2 + $0x8] sm:$0xff]
        %298 = vst [vmem:[%s107] sm:$0xff] %v296
        %vm299 = vcmask 203776
        %300 = vst.msk [vmem:[%s107 + $0x8] sm:$0xff] %vm299, %v297
        %s301 = sand.u32 %s49, 1
        %s302 = scalar_lea.sflag [#allocation4], %s301
        %s303 = sand.u32 %s49, 1
        %s304 = smul.addr %s303, 16
        %s305 = scalar_lea.vmem [#allocation3], %s304
        // Predicated region
        $region25: #{tpu_custom_call.1} parent=23 // pred_check
          %p306 = pneg %p59
        $region26: #{tpu_custom_call.1} parent=23 // pred_check_branch
          %308 = sbr.rel (%p306) target = $region28
        $region27: #{tpu_custom_call.1} parent=23 // pred_region
          %s310 = ssub.s32 256, 256
          %311 = vsyncadd %s302, %s310
          %s312 = smul.addr %s15, 2
          %s313 = smul.addr %s312, 128
          %s314 = scalar_lea.hbm %s1, %s313
          %s316 = sshll.u32 %s305, 4
          %s317 = int_to_ptr.vmem [resolvable:$true] %s316
          %319 = dma.vmem_to_hbm [thread:$0]  %s317, 256, %s314, %s302
        $region28: #{tpu_custom_call.1} parent=23 // pred_fallthru
          _
      $region24: #{tpu_custom_call.1} parent=5 // pred_fallthru
        _
      %p320 = scmp.le.s32.totalorder 2, %s10
      // Predicated region
      $region29: #{tpu_custom_call.1} parent=5 // pred_check
        %p321 = pneg %p320
      $region30: #{tpu_custom_call.1} parent=5 // pred_check_branch
        %323 = sbr.rel (%p321) target = $region32
      $region31: #{tpu_custom_call.1} parent=5 // pred_region
        %s324 = ssub.s32 %s10, 2
        // Predicated region
        $region33: #{tpu_custom_call.1} parent=31 // pred_check
          %p325 = pneg %p65
        $region34: #{tpu_custom_call.1} parent=31 // pred_check_branch
          %327 = sbr.rel (%p325) target = $region36
        $region35: #{tpu_custom_call.1} parent=31 // pred_region
          %s328 = sand.u32 %s50, 1
          %s329 = scalar_lea.sflag [#allocation4], %s328
          %s330 = sand.u32 %s50, 1
          %s331 = smul.addr %s330, 16
          %s332 = scalar_lea.vmem [#allocation3], %s331
          %333 = dma.done %s329, 256
        $region36: #{tpu_custom_call.1} parent=31 // pred_fallthru
          _
      $region32: #{tpu_custom_call.1} parent=5 // pred_fallthru
        _
    $region6: #{tpu_custom_call.1} parent=1 // loop_footer
      %s14 = sadd.s32 1, %s10
    $region7: #{tpu_custom_call.1} parent=1 // loop_footer_branch
      %9 = sbr.rel target = $region3
    $region8: #{tpu_custom_call.1} parent=1 // loop_exit
      _
    %334 = vsyncpa [#allocation4], 1
    %s335 = scalar_lea.sflag [#allocation4], 1
    %336 = vsyncpa %s335, 1

</llo_original>
